<compile_context>
chip_gen: v7x
topology: tpu7x:2x2x1
jax: 0.10.0
libtpu: 0.0.40
codegen_flags: <defaults>
</compile_context>

<pallas_src>
import jax
import jax.numpy as jnp
from jax.experimental import pallas as pl
from jax.experimental.pallas import tpu as pltpu


def _bmm_kernel(att_ref, y_ref, out_ref):
    # att_ref: (Bt, M, N), y_ref: (Bt, N, D), out_ref: (Bt, M, D)
    out_ref[...] = jax.lax.dot_general(
        att_ref[...],
        y_ref[...],
        dimension_numbers=(((2,), (1,)), ((0,), (0,))),   # batched matmul
        preferred_element_type=jnp.float32,
    ).astype(out_ref.dtype)


def _choose_batch_block(B, M, N, D, itemsize, vmem_budget_bytes=6 << 20):
    """Largest Bt such that the double-buffered in/out block set stays within
    a conservative VMEM budget (fits v5e's 16 MiB default scoped VMEM)."""
    per_b = (M * N + N * D + M * D) * itemsize * 2      # x2: double buffering
    bt = max(1, vmem_budget_bytes // max(per_b, 1))
    return int(min(B, bt))


def apply_soft_attention(y, att):
    """y: (B, N, D), att: (B, M, N). Returns att @ y with shape (B, M, D)."""
    B, M, N = att.shape
    By, Ny, D = y.shape
    assert B == By and N == Ny, "att/y batch or contraction dims mismatch"

    bt = _choose_batch_block(B, M, N, D, jnp.dtype(y.dtype).itemsize)
    grid = (pl.cdiv(B, bt),)

    cost = pl.CostEstimate(
        flops=2 * B * M * N * D,
        transcendentals=0,
        bytes_accessed=jnp.dtype(y.dtype).itemsize * (B * M * N + B * N * D + B * M * D),
    )

    return pl.pallas_call(
        _bmm_kernel,
        out_shape=jax.ShapeDtypeStruct((B, M, D), y.dtype),
        grid_spec=pltpu.PrefetchScalarGridSpec(
            num_scalar_prefetch=0,
            grid=grid,
            in_specs=[
                pl.BlockSpec((bt, M, N), lambda i: (i, 0, 0)),   # att block
                pl.BlockSpec((bt, N, D), lambda i: (i, 0, 0)),   # y block
            ],
            out_specs=pl.BlockSpec((bt, M, D), lambda i: (i, 0, 0)),
        ),
        compiler_params=pltpu.CompilerParams(
            dimension_semantics=("parallel",),                   # batch blocks independent
        ),
        cost_estimate=cost,
    )(att, y)


# ----------------------------- pure-JAX reference ----------------------------
def reference_forward(y, att):
    return jnp.einsum("bmn,bnd->bmd", att, y)


if __name__ == "__main__":
    B, S, D = 2, 8, 32      # batch, seq (att is seq x seq), hidden

    key = jax.random.PRNGKey(0)
    k_y, k_a = jax.random.split(key, 2)

    y = jax.random.normal(k_y, (B, S, D), jnp.float32)
    # soft-attention weights: rows sum to 1 (mimics the NISQA alignment matrix)
    att_logits = jax.random.normal(k_a, (B, S, S), jnp.float32)
    att = jax.nn.softmax(att_logits, axis=-1)

    out = apply_soft_attention(y, att)
    out = jax.block_until_ready(out)

    ref = reference_forward(y, att)
    assert out.shape == (B, S, D)
    assert jnp.allclose(out, ref, atol=1e-5, rtol=1e-5), "mismatch vs pure-JAX reference"

    print("KERNEL_OK")
</pallas_src>

<mosaic_0001>
module attributes {stable_mosaic.version = 11 : i64} {
  func.func @_bmm_kernel(%arg0: i32, %arg1: memref<2x8x8xf32, #tpu.memory_space<vmem>>, %arg2: memref<2x8x32xf32, #tpu.memory_space<vmem>>, %arg3: memref<2x8x32xf32, #tpu.memory_space<vmem>>) attributes {dimension_semantics = [#tpu.dimension_semantics<parallel>], iteration_bounds = array<i64: 1>, scalar_prefetch = 0 : i64, scratch_operands = 0 : i64, tpu.core_type = #tpu.core_type<tc>, window_params = [{transform_indices = @transform_0, window_bounds = array<i64: 2, 8, 8>}, {transform_indices = @transform_1, window_bounds = array<i64: 2, 8, 32>}, {transform_indices = @transform_2, window_bounds = array<i64: 2, 8, 32>}]} {
    %c0 = arith.constant 0 : index
    %c0_0 = arith.constant 0 : index
    %c0_1 = arith.constant 0 : index
    %0 = vector.load %arg1[%c0, %c0_0, %c0_1] : memref<2x8x8xf32, #tpu.memory_space<vmem>>, vector<2x8x8xf32>
    %c0_2 = arith.constant 0 : index
    %c0_3 = arith.constant 0 : index
    %c0_4 = arith.constant 0 : index
    %1 = vector.load %arg2[%c0_2, %c0_3, %c0_4] : memref<2x8x32xf32, #tpu.memory_space<vmem>>, vector<2x8x32xf32>
    %cst = arith.constant dense<0.000000e+00> : vector<2x8x32xf32>
    %2 = tpu.matmul %0, %1, %cst {dimension_numbers = #tpu.dot_dimension_numbers<[2], [1], [1], [2], [0, 0, 0, 1, 1, 2], [0], [0]>} : vector<2x8x8xf32>, vector<2x8x32xf32>, vector<2x8x32xf32> -> vector<2x8x32xf32>
    %c0_5 = arith.constant 0 : index
    %c0_6 = arith.constant 0 : index
    %c0_7 = arith.constant 0 : index
    %3 = vector.load %arg3[%c0_5, %c0_6, %c0_7] : memref<2x8x32xf32, #tpu.memory_space<vmem>>, vector<2x8x32xf32>
    tpu.vector_store %arg3[%c0_5, %c0_6, %c0_7], %2 {strides = array<i32>} : memref<2x8x32xf32, #tpu.memory_space<vmem>>, vector<2x8x32xf32>,
    return
  }
  func.func @transform_0(%arg0: i32) -> (i32, i32, i32) {
    %c0_i32 = arith.constant 0 : i32
    %c0_i32_0 = arith.constant 0 : i32
    %c0_i32_1 = arith.constant 0 : i32
    return %arg0, %c0_i32, %c0_i32_0 : i32, i32, i32
  }
  func.func @transform_1(%arg0: i32) -> (i32, i32, i32) {
    %c0_i32 = arith.constant 0 : i32
    %c0_i32_0 = arith.constant 0 : i32
    %c0_i32_1 = arith.constant 0 : i32
    return %arg0, %c0_i32, %c0_i32_0 : i32, i32, i32
  }
  func.func @transform_2(%arg0: i32) -> (i32, i32, i32) {
    %c0_i32 = arith.constant 0 : i32
    %c0_i32_0 = arith.constant 0 : i32
    %c0_i32_1 = arith.constant 0 : i32
    return %arg0, %c0_i32, %c0_i32_0 : i32, i32, i32
  }
}

</mosaic_0001>

<llo_original>
// kernel: tpu_custom_call.1
$region0: #{tpu_custom_call.1}
  #allocation0 [shape = 'u32[]', space=smem, size = 0x4, offset = 0x4, fixed_abs, tag = 'smem constant byte address 0x4 - core index']
  #allocation1 [shape = 'u32[144,128]{1,0:T(1,128)}', space=vmem, size = 0x12000, scoped, tag = 'internal scratch']
  %s0 = inlined_call_operand.hbm [shape: f32[2,8,8], index: 0, kind: input, shape index: {}]
  %s1 = inlined_call_operand.hbm [shape: f32[2,8,32], index: 1, kind: input, shape index: {}]
  %s2 = inlined_call_operand.hbm [shape: f32[2,8,32], index: 2, kind: output, shape index: {}]
  %s3 = sld [smem:[#allocation0]]
  $region26: #{tpu_custom_call.1} parent=0
    _
  %s5 = ssub.s32 1, %s3
  %s6 = scalar_select 0, %s5, %s3
  $region1: #{tpu_custom_call.1} parent=0
    #allocation2 [shape = 'u8[8192]{0}', space=vmem, size = 0x2000, scoped, tag = 'input window, operand 0, single buffered']
    #allocation3 [shape = 's32[1]{0}', space=sflag, size = 0x4, scoped, tag = 'scoped memory for tpu_custom_call.1']
    #allocation4 [shape = 's32[1]{0}', space=sflag, size = 0x4, scoped, tag = 'scoped memory for tpu_custom_call.1']
    #allocation5 [shape = 'u8[8192]{0}', space=vmem, size = 0x2000, scoped, tag = 'input window, operand 1, single buffered']
    #allocation6 [shape = 's32[1]{0}', space=sflag, size = 0x4, scoped, tag = 'scoped memory for tpu_custom_call.1']
    #allocation7 [shape = 'u8[8192]{0}', space=vmem, size = 0x2000, scoped, tag = 'output window, operand 0, single buffered']
    %7 = vsyncpa [#allocation3], 0
    %8 = vsyncpa [#allocation6], 0
    %9 = vsyncpa [#allocation4], 0
    // Predicated region
    $region2: #{tpu_custom_call.1} parent=1 // pred_check
      _
    $region3: #{tpu_custom_call.1} parent=1 // pred_check_branch
      %11 = sbr.rel (0) target = $region5
    $region4: #{tpu_custom_call.1} parent=1 // pred_region
      %s13 = ssub.s32 256, 256
      %14 = vsyncadd [#allocation3], %s13
      %s15 = sshll.u32 [#allocation2], 4
      %s16 = int_to_ptr.vmem [resolvable:$true] %s15
      %21 = dma.hbm_to_vmem [thread:$0]  %s0, 256, %s16, [#allocation3], 128, 128, 8
    $region5: #{tpu_custom_call.1} parent=1 // pred_fallthru
      _
    // Predicated region
    $region6: #{tpu_custom_call.1} parent=1 // pred_check
      _
    $region7: #{tpu_custom_call.1} parent=1 // pred_check_branch
      %23 = sbr.rel (0) target = $region9
    $region8: #{tpu_custom_call.1} parent=1 // pred_region
      %s25 = ssub.s32 256, 256
      %26 = vsyncadd [#allocation6], %s25
      %s27 = sshll.u32 [#allocation5], 4
      %s28 = int_to_ptr.vmem [resolvable:$true] %s27
      %33 = dma.hbm_to_vmem [thread:$0]  %s1, 256, %s28, [#allocation6], 128, 128, 8
    $region9: #{tpu_custom_call.1} parent=1 // pred_fallthru
      _
    // Predicated region
    $region10: #{tpu_custom_call.1} parent=1 // pred_check
      _
    $region11: #{tpu_custom_call.1} parent=1 // pred_check_branch
      %35 = sbr.rel (0) target = $region13
    $region12: #{tpu_custom_call.1} parent=1 // pred_region
      %36 = dma.done [#allocation3], 256
    $region13: #{tpu_custom_call.1} parent=1 // pred_fallthru
      _
    // Predicated region
    $region14: #{tpu_custom_call.1} parent=1 // pred_check
      _
    $region15: #{tpu_custom_call.1} parent=1 // pred_check_branch
      %38 = sbr.rel (0) target = $region17
    $region16: #{tpu_custom_call.1} parent=1 // pred_region
      %39 = dma.done [#allocation6], 256
    $region17: #{tpu_custom_call.1} parent=1 // pred_fallthru
      _
    %v40 = vld [vmem:[#allocation2] sm:$0xff]
    %v41 = vld [vmem:[#allocation2 + $0x8] sm:$0xff]
    %v42 = vld [vmem:[#allocation5] sm:$0xff]
    %v43 = vld [vmem:[#allocation5 + $0x8] sm:$0xff]
    %vm44 = vcmask 64512
    %v46 = vsel %vm44, %v40, 0
    %48 = vmatprep.subr.mxu0 0.0
    %49 = vmatpush1.msra.mxu0 %v42
    %50 = vmatprep.subr.mxu0 0.0
    %51 = vmatpush1.msra.mxu0 0.0
    %52 = vmatprep.subr.mxu0 0.0
    %53 = vmatpush1.msra.mxu0 0.0
    %54 = vmatprep.subr.mxu0 0.0
    %55 = vmatpush1.msra.mxu0 0.0
    %56 = vmatprep.subr.mxu0 0.0
    %57 = vmatpush1.msra.mxu0 0.0
    %58 = vmatprep.subr.mxu0 0.0
    %59 = vmatpush1.msra.mxu0 0.0
    %60 = vmatprep.subr.mxu0 0.0
    %61 = vmatpush1.msra.mxu0 0.0
    %62 = vmatprep.subr.mxu0 0.0
    %63 = vmatpush1.msra.mxu0 0.0
    %64 = vmatprep.subr.mxu0 0.0
    %65 = vmatpush1.msra.mxu0 0.0
    %66 = vmatprep.subr.mxu0 0.0
    %67 = vmatpush1.msra.mxu0 0.0
    %68 = vmatprep.subr.mxu0 0.0
    %69 = vmatpush1.msra.mxu0 0.0
    %70 = vmatprep.subr.mxu0 0.0
    %71 = vmatpush1.msra.mxu0 0.0
    %72 = vmatprep.subr.mxu0 0.0
    %73 = vmatpush1.msra.mxu0 0.0
    %74 = vmatprep.subr.mxu0 0.0
    %75 = vmatpush1.msra.mxu0 0.0
    %76 = vmatprep.subr.mxu0 0.0
    %77 = vmatpush1.msra.mxu0 0.0
    %78 = vmatprep.subr.mxu0 0.0
    %79 = vmatpush1.msra.mxu0 0.0
    %80 = vmatprep.subr.mxu0 0.0
    %81 = vmatpush1.msra.mxu0 0.0
    %82 = vmatprep.subr.mxu0 0.0
    %83 = vmatpush1.msra.mxu0 0.0
    %84 = vmatprep.subr.mxu0 0.0
    %85 = vmatpush1.msra.mxu0 0.0
    %86 = vmatprep.subr.mxu0 0.0
    %87 = vmatpush1.msra.mxu0 0.0
    %88 = vmatprep.subr.mxu0 0.0
    %89 = vmatpush1.msra.mxu0 0.0
    %90 = vmatprep.subr.mxu0 0.0
    %91 = vmatpush1.msra.mxu0 0.0
    %92 = vmatprep.subr.mxu0 0.0
    %93 = vmatpush1.msra.mxu0 0.0
    %94 = vmatprep.subr.mxu0 0.0
    %95 = vmatpush1.msra.mxu0 0.0
    %96 = vmatprep.subr.mxu0 0.0
    %97 = vmatpush1.msra.mxu0 0.0
    %98 = vmatprep.subr.mxu0 0.0
    %99 = vmatpush1.msra.mxu0 0.0
    %100 = vmatprep.subr.mxu0 0.0
    %101 = vmatpush1.msra.mxu0 0.0
    %102 = vmatprep.subr.mxu0 0.0
    %103 = vmatpush1.msra.mxu0 0.0
    %104 = vmatprep.subr.mxu0 0.0
    %105 = vmatpush1.msra.mxu0 0.0
    %106 = vmatprep.subr.mxu0 0.0
    %107 = vmatpush1.msra.mxu0 0.0
    %108 = vmatprep.subr.mxu0 0.0
    %109 = vmatpush1.msra.mxu0 0.0
    %110 = vmatprep.subr.mxu0 0.0
    %111 = vmatpush1.msra.mxu0 0.0
    %112 = vmatprep.mubr.f32.mxu0 0.0
    %113 = vmatmul.mubr.f32.gmra.mrb[0].mxu0 %v46
    %v114 = vpop.f32.mrb[0].mxu0
    %v115 = vadd.f32 0.0, %v114
    %v116 = vpop.f32.mrb[0].mxu0
    %117 = vdwg.mxu0
    %v119 = vsel %vm44, %v41, 0
    %121 = vmatprep.subr.mxu0 0.0
    %122 = vmatpush1.msra.mxu0 %v43
    %123 = vmatprep.subr.mxu0 0.0
    %124 = vmatpush1.msra.mxu0 0.0
    %125 = vmatprep.subr.mxu0 0.0
    %126 = vmatpush1.msra.mxu0 0.0
    %127 = vmatprep.subr.mxu0 0.0
    %128 = vmatpush1.msra.mxu0 0.0
    %129 = vmatprep.subr.mxu0 0.0
    %130 = vmatpush1.msra.mxu0 0.0
    %131 = vmatprep.subr.mxu0 0.0
    %132 = vmatpush1.msra.mxu0 0.0
    %133 = vmatprep.subr.mxu0 0.0
    %134 = vmatpush1.msra.mxu0 0.0
    %135 = vmatprep.subr.mxu0 0.0
    %136 = vmatpush1.msra.mxu0 0.0
    %137 = vmatprep.subr.mxu0 0.0
    %138 = vmatpush1.msra.mxu0 0.0
    %139 = vmatprep.subr.mxu0 0.0
    %140 = vmatpush1.msra.mxu0 0.0
    %141 = vmatprep.subr.mxu0 0.0
    %142 = vmatpush1.msra.mxu0 0.0
    %143 = vmatprep.subr.mxu0 0.0
    %144 = vmatpush1.msra.mxu0 0.0
    %145 = vmatprep.subr.mxu0 0.0
    %146 = vmatpush1.msra.mxu0 0.0
    %147 = vmatprep.subr.mxu0 0.0
    %148 = vmatpush1.msra.mxu0 0.0
    %149 = vmatprep.subr.mxu0 0.0
    %150 = vmatpush1.msra.mxu0 0.0
    %151 = vmatprep.subr.mxu0 0.0
    %152 = vmatpush1.msra.mxu0 0.0
    %153 = vmatprep.subr.mxu0 0.0
    %154 = vmatpush1.msra.mxu0 0.0
    %155 = vmatprep.subr.mxu0 0.0
    %156 = vmatpush1.msra.mxu0 0.0
    %157 = vmatprep.subr.mxu0 0.0
    %158 = vmatpush1.msra.mxu0 0.0
    %159 = vmatprep.subr.mxu0 0.0
    %160 = vmatpush1.msra.mxu0 0.0
    %161 = vmatprep.subr.mxu0 0.0
    %162 = vmatpush1.msra.mxu0 0.0
    %163 = vmatprep.subr.mxu0 0.0
    %164 = vmatpush1.msra.mxu0 0.0
    %165 = vmatprep.subr.mxu0 0.0
    %166 = vmatpush1.msra.mxu0 0.0
    %167 = vmatprep.subr.mxu0 0.0
    %168 = vmatpush1.msra.mxu0 0.0
    %169 = vmatprep.subr.mxu0 0.0
    %170 = vmatpush1.msra.mxu0 0.0
    %171 = vmatprep.subr.mxu0 0.0
    %172 = vmatpush1.msra.mxu0 0.0
    %173 = vmatprep.subr.mxu0 0.0
    %174 = vmatpush1.msra.mxu0 0.0
    %175 = vmatprep.subr.mxu0 0.0
    %176 = vmatpush1.msra.mxu0 0.0
    %177 = vmatprep.subr.mxu0 0.0
    %178 = vmatpush1.msra.mxu0 0.0
    %179 = vmatprep.subr.mxu0 0.0
    %180 = vmatpush1.msra.mxu0 0.0
    %181 = vmatprep.subr.mxu0 0.0
    %182 = vmatpush1.msra.mxu0 0.0
    %183 = vmatprep.subr.mxu0 0.0
    %184 = vmatpush1.msra.mxu0 0.0
    %185 = vmatprep.mubr.f32.mxu0 0.0
    %186 = vmatmul.mubr.f32.gmra.mrb[0].mxu0 %v119
    %v187 = vpop.f32.mrb[0].mxu0
    %v188 = vadd.f32 0.0, %v187
    %v189 = vpop.f32.mrb[0].mxu0
    %190 = vdwg.mxu0
    %vm191 = vcmask 261120
    %192 = vst.msk [vmem:[#allocation7] sm:$0xff] %vm191, %v115
    %193 = vst.msk [vmem:[#allocation7 + $0x8] sm:$0xff] %vm191, %v188
    // Predicated region
    $region18: #{tpu_custom_call.1} parent=1 // pred_check
      _
    $region19: #{tpu_custom_call.1} parent=1 // pred_check_branch
      %195 = sbr.rel (0) target = $region21
    $region20: #{tpu_custom_call.1} parent=1 // pred_region
      %s197 = ssub.s32 256, 256
      %198 = vsyncadd [#allocation4], %s197
      %s199 = sshll.u32 [#allocation7], 4
      %s200 = int_to_ptr.vmem [resolvable:$true] %s199
      %205 = dma.vmem_to_hbm [thread:$0]  %s200, 256, %s2, [#allocation4], 128, 128, 8
    $region21: #{tpu_custom_call.1} parent=1 // pred_fallthru
      _
    // Predicated region
    $region22: #{tpu_custom_call.1} parent=1 // pred_check
      _
    $region23: #{tpu_custom_call.1} parent=1 // pred_check_branch
      %207 = sbr.rel (0) target = $region25
    $region24: #{tpu_custom_call.1} parent=1 // pred_region
      %208 = dma.done [#allocation4], 256
    $region25: #{tpu_custom_call.1} parent=1 // pred_fallthru
      _
    %209 = vsyncpa [#allocation3], 1
    %210 = vsyncpa [#allocation6], 1
    %211 = vsyncpa [#allocation4], 1

</llo_original>
